<compile_context>
chip_gen: v6e
topology: v6e:2x2x1
jax: 0.10.0
libtpu: 0.0.40
codegen_flags: <defaults>
</compile_context>

<pallas_src>
import functools

import jax
import jax.numpy as jnp
from jax.experimental import pallas as pl
from jax.experimental.pallas import tpu as pltpu

_HALO = 128  # lane-aligned halo width (covers taps-per-phase M-1 <= 128)


def _phase_deconv_kernel(xm_ref, xh_ref, w_ref, b_ref, o_ref, win_ref, *,
                         m_taps, r_tile):
    """One (batch, time-tile) grid step.

    xm_ref : (1, C_in, r_tile)        main activation block (time on lanes)
    xh_ref : (1, C_in, _HALO)         next-128-columns halo block
    w_ref  : (M, N_rows, C_in)        phase-major weights, N_rows = pad8(P*C_out)
    b_ref  : (N_rows, 1)              phase-replicated bias (zero in pad rows)
    o_ref  : (1, N_rows, r_tile)      phase-major output block (time on lanes)
    win_ref: (C_in, r_tile + _HALO)   VMEM scratch: main || halo window
    """
    # Assemble the halo window with two aligned stores into VMEM scratch.
    win_ref[:, :r_tile] = xm_ref[0]
    win_ref[:, r_tile:] = xh_ref[0]

    # Chained MXU accumulation over the M taps.  acc is initialised from the
    # first dot (no zero-init + add pass); per-tap rhs is a shifted ref load.
    d = m_taps - 1
    acc = jnp.dot(w_ref[0], win_ref[:, d:d + r_tile],
                  preferred_element_type=jnp.float32)
    for m in range(1, m_taps):
        d = m_taps - 1 - m
        acc = acc + jnp.dot(w_ref[m], win_ref[:, d:d + r_tile],
                            preferred_element_type=jnp.float32)
    o_ref[0] = (acc + b_ref[...]).astype(o_ref.dtype)


def _vmem_need_bytes(rt, c_in, n_rows, m_taps):
    # Double-buffered in/out/weight blocks + single scratch window (f32).
    dbl = 2 * 4 * (c_in * rt + c_in * _HALO + n_rows * rt
                   + m_taps * n_rows * c_in + n_rows)
    return dbl + 4 * c_in * (rt + _HALO)


def causal_conv_transpose1d(x, weight, bias, stride, *, r_tile_cap=2048):
    """Forward pass of CausalConvTranspose1d.

    Args:
      x:      (B, C_in, T)      float32  (PyTorch NCW layout)
      weight: (C_in, C_out, K)  float32  (PyTorch ConvTranspose1d layout)
      bias:   (C_out,)          float32
      stride: int

    Returns:
      (B, C_out, T*stride + K - 2*stride) float32
    """
    B, C_in, T = x.shape
    C_in_w, C_out, K = weight.shape
    assert C_in_w == C_in
    P = int(stride)
    M = -(-K // P)                               # taps per output phase
    assert M - 1 <= _HALO
    T_out = T * P + K - 2 * P                    # cropped output length
    assert T_out > 0
    R = -(-T_out // P)                           # output rows per phase
    N_rows = -(-(P * C_out) // 8) * 8            # padded MXU/store rows

    # --- pick r_tile: largest 128-multiple under the VMEM budget -------------
    r_need = ((R + 127) // 128) * 128
    r_tile = max(128, min((r_tile_cap // 128) * 128, r_need))
    while r_tile > 128 and _vmem_need_bytes(r_tile, C_in, N_rows, M) > 24 * 2**20:
        r_tile -= 128
    nt = -(-R // r_tile)
    L_g = nt * r_tile + _HALO                    # padded input length

    # --- padded NCW input (single fused concat+pad pass; no gathers) ---------
    # x_g[j] == xp[j - (M-2)] with zeros outside, xp = replication-padded x.
    if M >= 2:
        src = jnp.concatenate([x[:, :, :1], x], axis=2)      # (B, C_in, T+1)
        left = M - 2
    else:
        src = x                                               # xp[:, :, 1:] == x
        left = 0
    right = L_g - left - src.shape[2]
    assert right >= 0
    x_g = jnp.pad(src, ((0, 0), (0, 0), (left, right)))       # (B, C_in, L_g)

    # --- phase-major weights / bias (one pad+reshape+transpose, no scatters) -
    w_pad = jnp.pad(weight, ((0, 0), (0, 0), (0, M * P - K)))  # zero taps k>=K
    w_big = jnp.transpose(w_pad.reshape(C_in, C_out, M, P), (2, 3, 1, 0))
    w_big = w_big.reshape(M, P * C_out, C_in)
    w_big = jnp.pad(w_big, ((0, 0), (0, N_rows - P * C_out), (0, 0)))
    b_big = jnp.pad(jnp.tile(bias, P), (0, N_rows - P * C_out)).reshape(N_rows, 1)

    kernel = functools.partial(_phase_deconv_kernel, m_taps=M, r_tile=r_tile)
    halo_blocks_per_tile = r_tile // _HALO

    y_raw = pl.pallas_call(
        kernel,
        out_shape=jax.ShapeDtypeStruct((B, N_rows, nt * r_tile), x.dtype),
        grid_spec=pltpu.PrefetchScalarGridSpec(
            num_scalar_prefetch=0,
            grid=(B, nt),
            in_specs=[
                # main activation block: columns [t*r_tile, (t+1)*r_tile)
                pl.BlockSpec((1, C_in, r_tile), lambda b, t: (b, 0, t)),
                # 128-lane halo block: columns [(t+1)*r_tile, (t+1)*r_tile+128)
                pl.BlockSpec((1, C_in, _HALO),
                             lambda b, t: (b, 0, (t + 1) * halo_blocks_per_tile)),
                # grid-invariant weights / bias stay resident in VMEM
                pl.BlockSpec((M, N_rows, C_in), lambda b, t: (0, 0, 0)),
                pl.BlockSpec((N_rows, 1), lambda b, t: (0, 0)),
            ],
            out_specs=pl.BlockSpec((1, N_rows, r_tile), lambda b, t: (b, 0, t)),
            scratch_shapes=[pltpu.VMEM((C_in, r_tile + _HALO), x.dtype)],
        ),
        compiler_params=pltpu.CompilerParams(
            dimension_semantics=("parallel", "parallel"),
            # Budgeted blocks stay <= ~24 MiB double-buffered, so 48 MiB scoped
            # VMEM is safe on every generation (incl. v7x's 64 MiB physical).
            vmem_limit_bytes=48 * 1024 * 1024),
    )(x_g, x_g, w_big, b_big)

    # --- glue: interleave stride phases back into NCW (B, C_out, T_out) ------
    y = y_raw[:, :P * C_out, :]                          # drop pad rows
    y = y.reshape(B, P, C_out, nt * r_tile)
    y = jnp.transpose(y, (0, 2, 3, 1)).reshape(B, C_out, nt * r_tile * P)
    return y[:, :, :T_out]


def _reference(x, weight, bias, stride):
    """Plain-JAX reference implementing the PyTorch semantics directly."""
    B, C_in, T = x.shape
    _, C_out, K = weight.shape
    xp = jnp.concatenate([x[:, :, :1], x], axis=2)            # replication pad
    Tp = T + 1
    L = (Tp - 1) * stride + K
    y = jnp.zeros((B, C_out, L), jnp.float32)
    for i in range(Tp):
        contrib = jnp.einsum('bc,cok->bok', xp[:, :, i], weight)  # (B,C_out,K)
        y = y.at[:, :, i * stride:i * stride + K].add(contrib)
    y = y + bias[None, :, None]
    return y[:, :, stride:-stride]


if __name__ == "__main__":
    B, C_in, C_out, T = 2, 4, 8, 16
    kernel_size, stride = 4, 2

    key = jax.random.PRNGKey(0)
    kx, kw, kb = jax.random.split(key, 3)
    x = jax.random.normal(kx, (B, C_in, T), dtype=jnp.float32)
    weight = 0.1 * jax.random.normal(kw, (C_in, C_out, kernel_size),
                                     dtype=jnp.float32)
    bias = 0.1 * jax.random.normal(kb, (C_out,), dtype=jnp.float32)

    y = causal_conv_transpose1d(x, weight, bias, stride)
    y = jax.block_until_ready(y)

    y_ref = _reference(x, weight, bias, stride)
    t_out = T * stride + kernel_size - 2 * stride
    assert y.shape == (B, C_out, t_out), y.shape
    assert y_ref.shape == y.shape, (y_ref.shape, y.shape)
    assert jnp.allclose(y, y_ref, atol=1e-5, rtol=1e-5), \
        float(jnp.max(jnp.abs(y - y_ref)))

    print("KERNEL_OK")
</pallas_src>

<mosaic_0001>
module attributes {stable_mosaic.version = 11 : i64} {
  func.func @_phase_deconv_kernel(%arg0: i32, %arg1: i32, %arg2: memref<1x4x128xf32, #tpu.memory_space<vmem>>, %arg3: memref<1x4x128xf32, #tpu.memory_space<vmem>>, %arg4: memref<2x16x4xf32, #tpu.memory_space<vmem>>, %arg5: memref<16x1xf32, #tpu.memory_space<vmem>>, %arg6: memref<1x16x128xf32, #tpu.memory_space<vmem>>, %arg7: memref<4x256xf32, #tpu.memory_space<vmem>>) attributes {dimension_semantics = [#tpu.dimension_semantics<parallel>, #tpu.dimension_semantics<parallel>], iteration_bounds = array<i64: 2, 1>, scalar_prefetch = 0 : i64, scratch_operands = 1 : i64, tpu.core_type = #tpu.core_type<tc>, window_params = [{transform_indices = @transform_0, window_bounds = array<i64: 1, 4, 128>}, {transform_indices = @transform_1, window_bounds = array<i64: 1, 4, 128>}, {pipeline_mode = #tpu.pipeline_mode<synchronous>, transform_indices = @transform_2, window_bounds = array<i64: 2, 16, 4>}, {pipeline_mode = #tpu.pipeline_mode<synchronous>, transform_indices = @transform_3, window_bounds = array<i64: 16, 1>}, {transform_indices = @transform_4, window_bounds = array<i64: 1, 16, 128>}]} {
    %c0 = arith.constant 0 : index
    %c0_0 = arith.constant 0 : index
    %c0_1 = arith.constant 0 : index
    %0 = vector.load %arg2[%c0, %c0_0, %c0_1] : memref<1x4x128xf32, #tpu.memory_space<vmem>>, vector<1x4x128xf32>
    %1 = vector.shape_cast %0 : vector<1x4x128xf32> to vector<4x128xf32>
    %c0_2 = arith.constant 0 : index
    %c0_3 = arith.constant 0 : index
    %2 = vector.load %arg7[%c0_2, %c0_3] : memref<4x256xf32, #tpu.memory_space<vmem>>, vector<4x128xf32>
    tpu.vector_store %arg7[%c0_2, %c0_3], %1 {strides = array<i32>} : memref<4x256xf32, #tpu.memory_space<vmem>>, vector<4x128xf32>,
    %c0_4 = arith.constant 0 : index
    %c0_5 = arith.constant 0 : index
    %c0_6 = arith.constant 0 : index
    %3 = vector.load %arg3[%c0_4, %c0_5, %c0_6] : memref<1x4x128xf32, #tpu.memory_space<vmem>>, vector<1x4x128xf32>
    %4 = vector.shape_cast %3 : vector<1x4x128xf32> to vector<4x128xf32>
    %c0_7 = arith.constant 0 : index
    %c128 = arith.constant 128 : index
    %5 = vector.load %arg7[%c0_7, %c128] : memref<4x256xf32, #tpu.memory_space<vmem>>, vector<4x128xf32>
    tpu.vector_store %arg7[%c0_7, %c128], %4 {strides = array<i32>} : memref<4x256xf32, #tpu.memory_space<vmem>>, vector<4x128xf32>,
    %c0_8 = arith.constant 0 : index
    %c0_9 = arith.constant 0 : index
    %c0_10 = arith.constant 0 : index
    %6 = vector.load %arg4[%c0_8, %c0_9, %c0_10] : memref<2x16x4xf32, #tpu.memory_space<vmem>>, vector<1x16x4xf32>
    %7 = vector.shape_cast %6 : vector<1x16x4xf32> to vector<16x4xf32>
    %c0_11 = arith.constant 0 : index
    %c1 = arith.constant 1 : index
    %8 = vector.load %arg7[%c0_11, %c1] : memref<4x256xf32, #tpu.memory_space<vmem>>, vector<4x128xf32>
    %cst = arith.constant dense<0.000000e+00> : vector<16x128xf32>
    %9 = tpu.matmul %7, %8, %cst {dimension_numbers = #tpu.dot_dimension_numbers<[1], [0], [0], [1], [0, 0, 1, 1], [], []>} : vector<16x4xf32>, vector<4x128xf32>, vector<16x128xf32> -> vector<16x128xf32>
    %c1_12 = arith.constant 1 : index
    %c0_13 = arith.constant 0 : index
    %c0_14 = arith.constant 0 : index
    %10 = vector.load %arg4[%c1_12, %c0_13, %c0_14] : memref<2x16x4xf32, #tpu.memory_space<vmem>>, vector<1x16x4xf32>
    %11 = vector.shape_cast %10 : vector<1x16x4xf32> to vector<16x4xf32>
    %c0_15 = arith.constant 0 : index
    %c0_16 = arith.constant 0 : index
    %12 = vector.load %arg7[%c0_15, %c0_16] : memref<4x256xf32, #tpu.memory_space<vmem>>, vector<4x128xf32>
    %cst_17 = arith.constant dense<0.000000e+00> : vector<16x128xf32>
    %13 = tpu.matmul %11, %12, %cst_17 {dimension_numbers = #tpu.dot_dimension_numbers<[1], [0], [0], [1], [0, 0, 1, 1], [], []>} : vector<16x4xf32>, vector<4x128xf32>, vector<16x128xf32> -> vector<16x128xf32>
    %14 = arith.addf %9, %13 : vector<16x128xf32>
    %c0_18 = arith.constant 0 : index
    %c0_19 = arith.constant 0 : index
    %15 = vector.load %arg5[%c0_18, %c0_19] : memref<16x1xf32, #tpu.memory_space<vmem>>, vector<16x1xf32>
    %16 = vector.broadcast %15 : vector<16x1xf32> to vector<16x128xf32>
    %17 = arith.addf %14, %16 : vector<16x128xf32>
    %c0_20 = arith.constant 0 : index
    %c0_21 = arith.constant 0 : index
    %c0_22 = arith.constant 0 : index
    %18 = vector.load %arg6[%c0_20, %c0_21, %c0_22] : memref<1x16x128xf32, #tpu.memory_space<vmem>>, vector<1x16x128xf32>
    %19 = vector.shape_cast %18 : vector<1x16x128xf32> to vector<16x128xf32>
    %20 = vector.shape_cast %17 : vector<16x128xf32> to vector<1x16x128xf32>
    tpu.vector_store %arg6[%c0_20, %c0_21, %c0_22], %20 {strides = array<i32>} : memref<1x16x128xf32, #tpu.memory_space<vmem>>, vector<1x16x128xf32>,
    return
  }
  func.func @transform_0(%arg0: i32, %arg1: i32) -> (i32, i32, i32) {
    %c0_i32 = arith.constant 0 : i32
    %c0_i32_0 = arith.constant 0 : i32
    return %arg0, %c0_i32, %arg1 : i32, i32, i32
  }
  func.func @transform_1(%arg0: i32, %arg1: i32) -> (i32, i32, i32) {
    %c1_i32 = arith.constant 1 : i32
    %0 = arith.addi %arg1, %c1_i32 : i32
    %c1_i32_0 = arith.constant 1 : i32
    %1 = arith.muli %0, %c1_i32_0 : i32
    %c0_i32 = arith.constant 0 : i32
    %c0_i32_1 = arith.constant 0 : i32
    return %arg0, %c0_i32, %1 : i32, i32, i32
  }
  func.func @transform_2(%arg0: i32, %arg1: i32) -> (i32, i32, i32) {
    %c0_i32 = arith.constant 0 : i32
    %c0_i32_0 = arith.constant 0 : i32
    %c0_i32_1 = arith.constant 0 : i32
    %c0_i32_2 = arith.constant 0 : i32
    return %c0_i32, %c0_i32_0, %c0_i32_1 : i32, i32, i32
  }
  func.func @transform_3(%arg0: i32, %arg1: i32) -> (i32, i32) {
    %c0_i32 = arith.constant 0 : i32
    %c0_i32_0 = arith.constant 0 : i32
    %c0_i32_1 = arith.constant 0 : i32
    return %c0_i32, %c0_i32_0 : i32, i32
  }
  func.func @transform_4(%arg0: i32, %arg1: i32) -> (i32, i32, i32) {
    %c0_i32 = arith.constant 0 : i32
    %c0_i32_0 = arith.constant 0 : i32
    return %arg0, %c0_i32, %arg1 : i32, i32, i32
  }
}

</mosaic_0001>

<llo_original>
// kernel: tpu_custom_call.1
$region0: #{tpu_custom_call.1}
  #allocation0 [shape = 'u32[]', space=smem, size = 0x4, offset = 0x4, fixed_abs, tag = 'smem constant byte address 0x4 - core index']
  #allocation1 [shape = 'u32[144,128]{1,0:T(1,128)}', space=vmem, size = 0x12000, scoped, tag = 'internal scratch']
  #allocation2 [shape = 'f32[4,256]{1,0:T(4,128)}', space=vmem, size = 0x1000, scoped, tag = 'scratch operand']
  %s0 = inlined_call_operand.vmem [shape: f32[2,4,256], index: 0, kind: input, shape index: {}]
  %s1 = inlined_call_operand.vmem [shape: f32[2,4,256], index: 1, kind: input, shape index: {}]
  %s2 = inlined_call_operand.vmem [shape: f32[2,16,4], index: 2, kind: input, shape index: {}]
  %s3 = inlined_call_operand.vmem [shape: f32[16,1], index: 3, kind: input, shape index: {}]
  %s4 = inlined_call_operand.hbm [shape: f32[2,16,128], index: 4, kind: output, shape index: {}]
  %s5 = sld [smem:[#allocation0]]
  $region49: #{tpu_custom_call.1} parent=0
    _
  %s7 = ssub.s32 1, %s5
  %s8 = scalar_select 0, %s7, %s5
  $region1: #{tpu_custom_call.1} parent=0
    #allocation3 [shape = 'u8[16384]{0}', space=vmem, size = 0x4000, scoped, tag = 'output window, operand 0']
    #allocation4 [shape = 's32[2]{0}', space=sflag, size = 0x8, scoped, tag = 'scoped memory for tpu_custom_call.1']
    %9 = vsyncpa [#allocation4], 0
    %s10 = scalar_lea.sflag [#allocation4], 1
    %11 = vsyncpa %s10, 0
    loop: start=0, step=1, limit=4
    $region2: #{tpu_custom_call.1} parent=1 // loop_pre_header
      _
    $region3: #{tpu_custom_call.1} parent=1 // loop_header
      %s13 = sphi 0, %s17
      %p14 = scmp.ge.s32.totalorder %s13, 4
      %s20 = sphi 0, %s32
      %s21 = sphi 0, %s28
      %s22 = sphi 0, %s20
      %s23 = sphi 0, %s21
      %s24 = sphi 0, %s22
      %s25 = sphi 0, %s23
      %s37 = sphi 0, %s39
      %s40 = sphi 0, %s37
      %s41 = sphi 0, %s40
      %s57 = sphi 0, %s41
      %s67 = sphi 0, %s69
      %s70 = sphi 0, %s67
      %s71 = sphi 0, %s70
      %s87 = sphi 0, %s71
      %s91 = sphi 0, %s91
      %s93 = sphi 0, %s91
      %s94 = sphi 0, %s93
      %s108 = sphi 0, %s94
      %s112 = sphi 0, %s112
      %s114 = sphi 0, %s112
      %s115 = sphi 0, %s114
      %s129 = sphi 0, %s115
      %s137 = sphi 0, %s139
      %s140 = sphi 0, %s137
      %s141 = sphi 0, %s140
      %s157 = sphi 0, %s141
    $region4: #{tpu_custom_call.1} parent=1 // loop_header_branch
      %16 = sbr.rel (%p14) target = $region8
    $region5: #{tpu_custom_call.1} parent=1 // loop_body
      %s18 = ssub.s32 %s13, 1
      %s19 = ssub.s32 %s13, 2
      %s26 = sadd.s32 1, %s21
      %p27 = scmp.ge.s32.totalorder %s26, 1
      %s28 = scalar_select %p27, 0, %s26
      %s29 = sadd.s32 1, %s20
      %s30 = scalar_select %p27, %s29, %s20
      %p31 = scmp.ge.s32.totalorder %s30, 2
      %s32 = scalar_select %p31, 0, %s30
      %s33 = ssub.s32 %s20, %s32
      %s34 = ssub.s32 %s21, %s28
      %s35 = sor.u32 %s33, %s34
      %p36 = scmp.eq.s32.totalorder %s35, 0
      %s38 = sadd.s32 %s37, 1
      %s39 = scalar_select %p36, %s37, %s38
      %p42 = pneg %p36
      %p43 = scmp.eq.s32.totalorder %s13, 1
      %p44 = por %p42, %p43
      %p45 = scmp.ne.s32.totalorder %s37, %s40
      %p46 = scmp.eq.s32.totalorder %s13, 0
      %p47 = por %p45, %p46
      %p48 = scmp.ne.s32.totalorder %s37, %s40
      %p49 = scmp.eq.s32.totalorder %s18, 1
      %p50 = por %p48, %p49
      %p51 = scmp.ne.s32.totalorder %s40, %s41
      %p52 = scmp.eq.s32.totalorder %s18, 0
      %p53 = por %p51, %p52
      %p54 = scmp.ne.s32.totalorder %s40, %s41
      %p55 = scmp.eq.s32.totalorder %s19, 1
      %p56 = por %p54, %p55
      %p58 = scmp.ne.s32.totalorder %s41, %s57
      %p59 = scmp.eq.s32.totalorder %s19, 0
      %p60 = por %p58, %p59
      %s61 = sadd.s32 %s21, 1
      %s62 = sadd.s32 %s28, 1
      %s63 = ssub.s32 %s20, %s32
      %s64 = ssub.s32 %s61, %s62
      %s65 = sor.u32 %s63, %s64
      %p66 = scmp.eq.s32.totalorder %s65, 0
      %s68 = sadd.s32 %s67, 1
      %s69 = scalar_select %p66, %s67, %s68
      %p72 = pneg %p66
      %p73 = scmp.eq.s32.totalorder %s13, 1
      %p74 = por %p72, %p73
      %p75 = scmp.ne.s32.totalorder %s67, %s70
      %p76 = scmp.eq.s32.totalorder %s13, 0
      %p77 = por %p75, %p76
      %p78 = scmp.ne.s32.totalorder %s67, %s70
      %p79 = scmp.eq.s32.totalorder %s18, 1
      %p80 = por %p78, %p79
      %p81 = scmp.ne.s32.totalorder %s70, %s71
      %p82 = scmp.eq.s32.totalorder %s18, 0
      %p83 = por %p81, %p82
      %p84 = scmp.ne.s32.totalorder %s70, %s71
      %p85 = scmp.eq.s32.totalorder %s19, 1
      %p86 = por %p84, %p85
      %p88 = scmp.ne.s32.totalorder %s71, %s87
      %p89 = scmp.eq.s32.totalorder %s19, 0
      %p90 = por %p88, %p89
      %s92 = sadd.s32 %s91, 1
      %p95 = scmp.eq.s32.totalorder %s13, 1
      %p96 = scmp.ne.s32.totalorder %s91, %s93
      %p97 = scmp.eq.s32.totalorder %s13, 0
      %p98 = por %p96, %p97
      %p99 = scmp.ne.s32.totalorder %s91, %s93
      %p100 = scmp.eq.s32.totalorder %s18, 1
      %p101 = por %p99, %p100
      %p102 = scmp.ne.s32.totalorder %s93, %s94
      %p103 = scmp.eq.s32.totalorder %s18, 0
      %p104 = por %p102, %p103
      %p105 = scmp.ne.s32.totalorder %s93, %s94
      %p106 = scmp.eq.s32.totalorder %s19, 1
      %p107 = por %p105, %p106
      %p109 = scmp.ne.s32.totalorder %s94, %s108
      %p110 = scmp.eq.s32.totalorder %s19, 0
      %p111 = por %p109, %p110
      %s113 = sadd.s32 %s112, 1
      %p116 = scmp.eq.s32.totalorder %s13, 1
      %p117 = scmp.ne.s32.totalorder %s112, %s114
      %p118 = scmp.eq.s32.totalorder %s13, 0
      %p119 = por %p117, %p118
      %p120 = scmp.ne.s32.totalorder %s112, %s114
      %p121 = scmp.eq.s32.totalorder %s18, 1
      %p122 = por %p120, %p121
      %p123 = scmp.ne.s32.totalorder %s114, %s115
      %p124 = scmp.eq.s32.totalorder %s18, 0
      %p125 = por %p123, %p124
      %p126 = scmp.ne.s32.totalorder %s114, %s115
      %p127 = scmp.eq.s32.totalorder %s19, 1
      %p128 = por %p126, %p127
      %p130 = scmp.ne.s32.totalorder %s115, %s129
      %p131 = scmp.eq.s32.totalorder %s19, 0
      %p132 = por %p130, %p131
      %s133 = ssub.s32 %s20, %s32
      %s134 = ssub.s32 %s21, %s28
      %s135 = sor.u32 %s133, %s134
      %p136 = scmp.eq.s32.totalorder %s135, 0
      %s138 = sadd.s32 %s137, 1
      %s139 = scalar_select %p136, %s137, %s138
      %p142 = pneg %p136
      %p143 = scmp.eq.s32.totalorder %s13, 1
      %p144 = por %p142, %p143
      %p145 = scmp.ne.s32.totalorder %s137, %s140
      %p146 = scmp.eq.s32.totalorder %s13, 0
      %p147 = por %p145, %p146
      %p148 = scmp.ne.s32.totalorder %s137, %s140
      %p149 = scmp.eq.s32.totalorder %s18, 1
      %p150 = por %p148, %p149
      %p151 = scmp.ne.s32.totalorder %s140, %s141
      %p152 = scmp.eq.s32.totalorder %s18, 0
      %p153 = por %p151, %p152
      %p154 = scmp.ne.s32.totalorder %s140, %s141
      %p155 = scmp.eq.s32.totalorder %s19, 1
      %p156 = por %p154, %p155
      %p158 = scmp.ne.s32.totalorder %s141, %s157
      %p159 = scmp.eq.s32.totalorder %s19, 0
      %p160 = por %p158, %p159
      %p161 = scmp.le.s32.totalorder 1, %s13
      %p162 = scmp.lt.s32.totalorder %s13, 3
      %p163 = pnand %p161, %p162
      %p164 = pneg %p163
      // Predicated region
      $region9: #{tpu_custom_call.1} parent=5 // pred_check
        _
      $region10: #{tpu_custom_call.1} parent=5 // pred_check_branch
        %166 = sbr.rel (%p163) target = $region12
      $region11: #{tpu_custom_call.1} parent=5 // pred_region
        %s167 = ssub.s32 %s13, 1
        // Predicated region
        $region13: #{tpu_custom_call.1} parent=11 // pred_check
          %p168 = pneg %p104
        $region14: #{tpu_custom_call.1} parent=11 // pred_check_branch
          %170 = sbr.rel (%p168) target = $region16
        $region15: #{tpu_custom_call.1} parent=11 // pred_region
          _
        $region16: #{tpu_custom_call.1} parent=11 // pred_fallthru
          _
        // Predicated region
        $region17: #{tpu_custom_call.1} parent=11 // pred_check
          %p171 = pneg %p125
        $region18: #{tpu_custom_call.1} parent=11 // pred_check_branch
          %173 = sbr.rel (%p171) target = $region20
        $region19: #{tpu_custom_call.1} parent=11 // pred_region
          _
        $region20: #{tpu_custom_call.1} parent=11 // pred_fallthru
          _
      $region12: #{tpu_custom_call.1} parent=5 // pred_fallthru
        _
      %p174 = scmp.lt.s32.totalorder %s13, 2
      // Predicated region
      $region21: #{tpu_custom_call.1} parent=5 // pred_check
        %p175 = pneg %p174
      $region22: #{tpu_custom_call.1} parent=5 // pred_check_branch
        %177 = sbr.rel (%p175) target = $region24
      $region23: #{tpu_custom_call.1} parent=5 // pred_region
        // Predicated region
        $region25: #{tpu_custom_call.1} parent=23 // pred_check
          %p178 = pneg %p47
        $region26: #{tpu_custom_call.1} parent=23 // pred_check_branch
          %180 = sbr.rel (%p178) target = $region28
        $region27: #{tpu_custom_call.1} parent=23 // pred_region
          %p181 = scmp.lt.s32.totalorder %s20, 1
          %s182 = scalar_select %p181, %s20, 1
          %p183 = scmp.lt.s32.totalorder %s21, 1
          %s184 = scalar_select %p183, %s21, 1
          %s185 = smul.addr %s182, 2
          %s186 = sadd.s32 %s184, %s185
          %s187 = smul.addr %s186, 4
          %s188 = scalar_lea.vmem %s0, %s187
        $region28: #{tpu_custom_call.1} parent=23 // pred_fallthru
          _
        // Predicated region
        $region29: #{tpu_custom_call.1} parent=23 // pred_check
          %p189 = pneg %p77
        $region30: #{tpu_custom_call.1} parent=23 // pred_check_branch
          %191 = sbr.rel (%p189) target = $region32
        $region31: #{tpu_custom_call.1} parent=23 // pred_region
          %s192 = sadd.s32 %s21, 1
          %p193 = scmp.lt.s32.totalorder %s20, 1
          %s194 = scalar_select %p193, %s20, 1
          %p195 = scmp.lt.s32.totalorder %s192, 1
          %s196 = scalar_select %p195, %s192, 1
          %s197 = smul.addr %s194, 2
          %s198 = sadd.s32 %s196, %s197
          %s199 = smul.addr %s198, 4
          %s200 = scalar_lea.vmem %s1, %s199
          %s201 = sadd.s32 %s21, 1
        $region32: #{tpu_custom_call.1} parent=23 // pred_fallthru
          _
      $region24: #{tpu_custom_call.1} parent=5 // pred_fallthru
        _
      %p202 = scmp.le.s32.totalorder 1, %s13
      %p203 = scmp.lt.s32.totalorder %s13, 3
      %p204 = pnand %p202, %p203
      %p205 = pneg %p204
      // Predicated region
      $region33: #{tpu_custom_call.1} parent=5 // pred_check
        _
      $region34: #{tpu_custom_call.1} parent=5 // pred_check_branch
        %207 = sbr.rel (%p204) target = $region36
      $region35: #{tpu_custom_call.1} parent=5 // pred_region
        %s208 = ssub.s32 %s13, 1
        %p209 = scmp.lt.s32.totalorder %s22, 1
        %s210 = scalar_select %p209, %s22, 1
        %p211 = scmp.lt.s32.totalorder %s23, 1
        %s212 = scalar_select %p211, %s23, 1
        %s213 = smul.addr %s210, 2
        %s214 = sadd.s32 %s212, %s213
        %s215 = smul.addr %s214, 4
        %s216 = scalar_lea.vmem %s0, %s215
        %p217 = pneg %p53
        %p218 = pneg %p50
        %s219 = sadd.s32 %s23, 1
        %p220 = scmp.lt.s32.totalorder %s22, 1
        %s221 = scalar_select %p220, %s22, 1
        %p222 = scmp.lt.s32.totalorder %s219, 1
        %s223 = scalar_select %p222, %s219, 1
        %s224 = smul.addr %s221, 2
        %s225 = sadd.s32 %s223, %s224
        %s226 = smul.addr %s225, 4
        %s227 = scalar_lea.vmem %s1, %s226
        %p228 = pneg %p83
        %p229 = pneg %p80
        %p230 = pneg %p104
        %p231 = pneg %p101
        %p232 = pneg %p125
        %p233 = pneg %p122
        %p234 = pneg %p153
        %p235 = pneg %p150
        %s236 = sand.u32 %s140, 1
        %s237 = scalar_lea.sflag [#allocation4], %s236
        %s238 = sand.u32 %s140, 1
        %s239 = smul.addr %s238, 16
        %s240 = scalar_lea.vmem [#allocation3], %s239
        %p241 = scmp.lt.s32.totalorder %s22, 1
        %s242 = scalar_select %p241, %s22, 1
        %p243 = scmp.lt.s32.totalorder %s23, 1
        %s244 = scalar_select %p243, %s23, 1
        %s245 = smul.addr %s242, 2
        %s246 = sadd.s32 %s244, %s245
        %s247 = smul.addr %s246, 4
        %s248 = scalar_lea.vmem %s0, %s247
        %s249 = sadd.s32 %s23, 1
        %p250 = scmp.lt.s32.totalorder %s22, 1
        %s251 = scalar_select %p250, %s22, 1
        %p252 = scmp.lt.s32.totalorder %s249, 1
        %s253 = scalar_select %p252, %s249, 1
        %s254 = smul.addr %s251, 2
        %s255 = sadd.s32 %s253, %s254
        %s256 = smul.addr %s255, 4
        %s257 = scalar_lea.vmem %s1, %s256
        %s258 = sadd.s32 %s23, 1
        %v259 = vld [vmem:[%s248] sm:$0xf]
        %260 = vst [vmem:[#allocation2] sm:$0xf] %v259
        %v261 = vld [vmem:[%s257] sm:$0xf]
        %262 = vst [vmem:[#allocation2 + $0x4] sm:$0xf] %v261
        %v263 = vld [vmem:[%s2] sm:$0xff]
        %v264 = vld [vmem:[%s2 + $0x8] sm:$0xff]
        %v265 = vld [vmem:[#allocation2] sm:$0xff]
        %s266 = scalar_lea.vmem %s2, 16
        %v267 = vld [vmem:[%s266] sm:$0xff]
        %v268 = vld [vmem:[%s266 + $0x8] sm:$0xff]
        %v269 = vld [vmem:[#allocation2] sm:$0xf]
        %vm270 = vcmask 31744
        %v272 = vsel %vm270, %v267, 0
        %v275 = vsel %vm270, %v268, 0
        %vm277 = vcmask 1043456
        %v279 = vsel %vm277, %v269, 0
        %281 = vmatprep.subr.mxu0 0.0
        %282 = vmatpush1.msra.mxu0 0.0
        %283 = vmatprep.subr.mxu0 0.0
        %284 = vmatpush1.msra.mxu0 0.0
        %285 = vmatprep.subr.mxu0 0.0
        %286 = vmatpush1.msra.mxu0 0.0
        %287 = vmatprep.subr.mxu0 0.0
        %288 = vmatpush1.msra.mxu0 0.0
        %289 = vmatprep.subr.mxu0 0.0
        %290 = vmatpush1.msra.mxu0 0.0
        %291 = vmatprep.subr.mxu0 0.0
        %292 = vmatpush1.msra.mxu0 0.0
        %293 = vmatprep.subr.mxu0 0.0
        %294 = vmatpush1.msra.mxu0 0.0
        %295 = vmatprep.subr.mxu0 0.0
        %296 = vmatpush1.msra.mxu0 0.0
        %297 = vmatprep.subr.mxu0 0.0
        %298 = vmatpush1.msra.mxu0 0.0
        %299 = vmatprep.subr.mxu0 0.0
        %300 = vmatpush1.msra.mxu0 0.0
        %301 = vmatprep.subr.mxu0 0.0
        %302 = vmatpush1.msra.mxu0 0.0
        %303 = vmatprep.subr.mxu0 0.0
        %304 = vmatpush1.msra.mxu0 0.0
        %305 = vmatprep.subr.mxu0 0.0
        %306 = vmatpush1.msra.mxu0 0.0
        %307 = vmatprep.subr.mxu0 0.0
        %308 = vmatpush1.msra.mxu0 0.0
        %309 = vmatprep.subr.mxu0 0.0
        %310 = vmatpush1.msra.mxu0 0.0
        %311 = vmatprep.subr.mxu0 0.0
        %312 = vmatpush1.msra.mxu0 %v279
        %313 = vmatprep.subr.mxu0 0.0
        %314 = vmatpush2.msra.mxu0 0.0
        %315 = vmatprep.subr.mxu0 0.0
        %316 = vmatpush2.msra.mxu0 0.0
        %317 = vmatprep.subr.mxu0 0.0
        %318 = vmatpush2.msra.mxu0 0.0
        %319 = vmatprep.subr.mxu0 0.0
        %320 = vmatpush2.msra.mxu0 0.0
        %321 = vmatprep.subr.mxu0 0.0
        %322 = vmatpush2.msra.mxu0 0.0
        %323 = vmatprep.subr.mxu0 0.0
        %324 = vmatpush2.msra.mxu0 0.0
        %325 = vmatprep.subr.mxu0 0.0
        %326 = vmatpush2.msra.mxu0 0.0
        %327 = vmatprep.subr.mxu0 0.0
        %328 = vmatpush2.msra.mxu0 0.0
        %329 = vmatprep.subr.mxu0 0.0
        %330 = vmatpush2.msra.mxu0 0.0
        %331 = vmatprep.subr.mxu0 0.0
        %332 = vmatpush2.msra.mxu0 0.0
        %333 = vmatprep.subr.mxu0 0.0
        %334 = vmatpush2.msra.mxu0 0.0
        %335 = vmatprep.subr.mxu0 0.0
        %336 = vmatpush2.msra.mxu0 0.0
        %337 = vmatprep.subr.mxu0 0.0
        %338 = vmatpush2.msra.mxu0 0.0
        %339 = vmatprep.subr.mxu0 0.0
        %340 = vmatpush2.msra.mxu0 0.0
        %341 = vmatprep.subr.mxu0 0.0
        %342 = vmatpush2.msra.mxu0 0.0
        %343 = vmatprep.subr.mxu0 0.0
        %344 = vmatpush2.msra.mxu0 0.0
        %345 = vmatprep.mubr.f32.mxu0 0.0
        %346 = vmatmul.mubr.f32.gmra.mxu0 %v272
        %v347 = vpop.f32.mrf.mxu0
        %v348 = vadd.f32 0.0, %v347
        %v349 = vpop.f32.mrf.mxu0
        %350 = vmatprep.mubr.f32.mxu0 0.0
        %351 = vmatmul.mubr.f32.gmra.mxu0 %v275
        %v352 = vpop.f32.mrf.mxu0
        %v353 = vadd.f32 0.0, %v352
        %v354 = vpop.f32.mrf.mxu0
        %355 = vdwg.mxu0
        %v357 = vcombine.high %v265, %v265
        %358 = vrot.lane.b32.xlu0 %v265, 127
        %v359 = vpop.permute.xlu0 %358
        %360 = vrot.lane.b32.xlu0 %v357, 127
        %v361 = vpop.permute.xlu0 %360
        %vm362 = vcmask 1039360
        %v363 = vsel %vm362, %v359, %v361
        %v365 = vsel %vm270, %v263, 0
        %v368 = vsel %vm270, %v264, 0
        %v370 = vsel %vm277, %v363, 0
        %372 = vmatprep.subr.mxu0 0.0
        %373 = vmatpush1.msra.mxu0 0.0
        %374 = vmatprep.subr.mxu0 0.0
        %375 = vmatpush1.msra.mxu0 0.0
        %376 = vmatprep.subr.mxu0 0.0
        %377 = vmatpush1.msra.mxu0 0.0
        %378 = vmatprep.subr.mxu0 0.0
        %379 = vmatpush1.msra.mxu0 0.0
        %380 = vmatprep.subr.mxu0 0.0
        %381 = vmatpush1.msra.mxu0 0.0
        %382 = vmatprep.subr.mxu0 0.0
        %383 = vmatpush1.msra.mxu0 0.0
        %384 = vmatprep.subr.mxu0 0.0
        %385 = vmatpush1.msra.mxu0 0.0
        %386 = vmatprep.subr.mxu0 0.0
        %387 = vmatpush1.msra.mxu0 0.0
        %388 = vmatprep.subr.mxu0 0.0
        %389 = vmatpush1.msra.mxu0 0.0
        %390 = vmatprep.subr.mxu0 0.0
        %391 = vmatpush1.msra.mxu0 0.0
        %392 = vmatprep.subr.mxu0 0.0
        %393 = vmatpush1.msra.mxu0 0.0
        %394 = vmatprep.subr.mxu0 0.0
        %395 = vmatpush1.msra.mxu0 0.0
        %396 = vmatprep.subr.mxu0 0.0
        %397 = vmatpush1.msra.mxu0 0.0
        %398 = vmatprep.subr.mxu0 0.0
        %399 = vmatpush1.msra.mxu0 0.0
        %400 = vmatprep.subr.mxu0 0.0
        %401 = vmatpush1.msra.mxu0 0.0
        %402 = vmatprep.subr.mxu0 0.0
        %403 = vmatpush1.msra.mxu0 %v370
        %404 = vmatprep.subr.mxu0 0.0
        %405 = vmatpush2.msra.mxu0 0.0
        %406 = vmatprep.subr.mxu0 0.0
        %407 = vmatpush2.msra.mxu0 0.0
        %408 = vmatprep.subr.mxu0 0.0
        %409 = vmatpush2.msra.mxu0 0.0
        %410 = vmatprep.subr.mxu0 0.0
        %411 = vmatpush2.msra.mxu0 0.0
        %412 = vmatprep.subr.mxu0 0.0
        %413 = vmatpush2.msra.mxu0 0.0
        %414 = vmatprep.subr.mxu0 0.0
        %415 = vmatpush2.msra.mxu0 0.0
        %416 = vmatprep.subr.mxu0 0.0
        %417 = vmatpush2.msra.mxu0 0.0
        %418 = vmatprep.subr.mxu0 0.0
        %419 = vmatpush2.msra.mxu0 0.0
        %420 = vmatprep.subr.mxu0 0.0
        %421 = vmatpush2.msra.mxu0 0.0
        %422 = vmatprep.subr.mxu0 0.0
        %423 = vmatpush2.msra.mxu0 0.0
        %424 = vmatprep.subr.mxu0 0.0
        %425 = vmatpush2.msra.mxu0 0.0
        %426 = vmatprep.subr.mxu0 0.0
        %427 = vmatpush2.msra.mxu0 0.0
        %428 = vmatprep.subr.mxu0 0.0
        %429 = vmatpush2.msra.mxu0 0.0
        %430 = vmatprep.subr.mxu0 0.0
        %431 = vmatpush2.msra.mxu0 0.0
        %432 = vmatprep.subr.mxu0 0.0
        %433 = vmatpush2.msra.mxu0 0.0
        %434 = vmatprep.subr.mxu0 0.0
        %435 = vmatpush2.msra.mxu0 0.0
        %436 = vmatprep.mubr.f32.mxu0 0.0
        %437 = vmatmul.mubr.f32.gmra.mxu0 %v365
        %v438 = vpop.f32.mrf.mxu0
        %v439 = vadd.f32 %v348, %v438
        %v440 = vpop.f32.mrf.mxu0
        %441 = vmatprep.mubr.f32.mxu0 0.0
        %442 = vmatmul.mubr.f32.gmra.mxu0 %v368
        %v443 = vpop.f32.mrf.mxu0
        %v444 = vadd.f32 %v353, %v443
        %v445 = vpop.f32.mrf.mxu0
        %446 = vdwg.mxu0
        %v447 = vld [vmem:[%s3] sm:$0xff]
        %v448 = vld [vmem:[%s3 + $0x8] sm:$0xff]
        %450 = vset.pattern.permute.xlu0 0
        %451 = vperm.xlu0 %450, %v447
        %v452 = vpop.permute.xlu0 %451
        %455 = vset.pattern.permute.xlu0 0
        %456 = vperm.xlu0 %455, %v448
        %v457 = vpop.permute.xlu0 %456
        %v459 = vadd.f32 %v439, %v452
        %v460 = vadd.f32 %v444, %v457
        %461 = vst [vmem:[%s240] sm:$0xff] %v459
        %462 = vst [vmem:[%s240 + $0x8] sm:$0xff] %v460
        %s463 = sand.u32 %s140, 1
        %s464 = scalar_lea.sflag [#allocation4], %s463
        %s465 = sand.u32 %s140, 1
        %s466 = smul.addr %s465, 16
        %s467 = scalar_lea.vmem [#allocation3], %s466
        // Predicated region
        $region37: #{tpu_custom_call.1} parent=35 // pred_check
          %p468 = pneg %p150
        $region38: #{tpu_custom_call.1} parent=35 // pred_check_branch
          %470 = sbr.rel (%p468) target = $region40
        $region39: #{tpu_custom_call.1} parent=35 // pred_region
          %s472 = ssub.s32 256, 256
          %473 = vsyncadd %s464, %s472
          %s474 = smul.addr %s22, 2
          %s475 = sadd.s32 %s23, %s474
          %s476 = smul.addr %s475, 128
          %s477 = scalar_lea.hbm %s4, %s476
          %s478 = sshll.u32 %s467, 4
          %s479 = int_to_ptr.vmem [resolvable:$true] %s478
          %484 = dma.vmem_to_hbm [thread:$0]  %s479, 256, %s477, %s464, 128, 128, 8
        $region40: #{tpu_custom_call.1} parent=35 // pred_fallthru
          _
      $region36: #{tpu_custom_call.1} parent=5 // pred_fallthru
        _
      %p485 = scmp.le.s32.totalorder 2, %s13
      // Predicated region
      $region41: #{tpu_custom_call.1} parent=5 // pred_check
        %p486 = pneg %p485
      $region42: #{tpu_custom_call.1} parent=5 // pred_check_branch
        %488 = sbr.rel (%p486) target = $region44
      $region43: #{tpu_custom_call.1} parent=5 // pred_region
        %s489 = ssub.s32 %s13, 2
        // Predicated region
        $region45: #{tpu_custom_call.1} parent=43 // pred_check
          %p490 = pneg %p156
        $region46: #{tpu_custom_call.1} parent=43 // pred_check_branch
          %492 = sbr.rel (%p490) target = $region48
        $region47: #{tpu_custom_call.1} parent=43 // pred_region
          %s493 = sand.u32 %s141, 1
          %s494 = scalar_lea.sflag [#allocation4], %s493
          %s495 = sand.u32 %s141, 1
          %s496 = smul.addr %s495, 16
          %s497 = scalar_lea.vmem [#allocation3], %s496
          %498 = dma.done %s494, 256
        $region48: #{tpu_custom_call.1} parent=43 // pred_fallthru
          _
      $region44: #{tpu_custom_call.1} parent=5 // pred_fallthru
        _
    $region6: #{tpu_custom_call.1} parent=1 // loop_footer
      %s17 = sadd.s32 1, %s13
    $region7: #{tpu_custom_call.1} parent=1 // loop_footer_branch
      %12 = sbr.rel target = $region3
    $region8: #{tpu_custom_call.1} parent=1 // loop_exit
      _
    %499 = vsyncpa [#allocation4], 1
    %s500 = scalar_lea.sflag [#allocation4], 1
    %501 = vsyncpa %s500, 1

</llo_original>
